<compile_context>
chip_gen: v6e
topology: v6e:2x2x1
jax: 0.10.0
libtpu: 0.0.40
codegen_flags: <defaults>
</compile_context>

<pallas_src>
import jax
import jax.numpy as jnp
from jax import lax
from jax.experimental import pallas as pl
from jax.experimental.pallas import tpu as pltpu


# N-tile for the lane dimension of both big matmuls.  256 fills the v6e/v7x
# 256-wide MXU; use 128 on v5e (4x128 MXU).
DEFAULT_TN = 256


def _round_up(x, m):
    return ((x + m - 1) // m) * m


def _pick_tm(M, tm_max):
    """Pick an M-tile: single tile when it fits, otherwise a multiple-of-8
    divisor of round_up(M, 8) near tm_max so no dead rows are padded in."""
    m8 = _round_up(M, 8)
    if m8 <= tm_max:
        return m8                       # one M tile, zero padded rows
    hi = tm_max - (tm_max % 8)
    for tm in range(hi, max(8, tm_max // 2) - 1, -8):
        if m8 % tm == 0:
            return tm
    return hi


# ---------------------------------------------------------------------------
# Generic lane-dense tiled matmul-plus-bias kernel:  out = x @ w + b
# Used for (a) the hoisted x @ W_ih + bias over all time steps and
# (b) the un-fused output projection hs @ W_fc + b_fc.
# ---------------------------------------------------------------------------
def _matmul_bias_kernel(x_ref, w_ref, b_ref, o_ref):
    o_ref[...] = (jnp.dot(x_ref[...], w_ref[...],
                          preferred_element_type=jnp.float32)
                  + b_ref[...])


def matmul_bias(x, w, b, *, tn=DEFAULT_TN, tm_max=512):
    """x: (M, K) f32, w: (K, N) f32 (N pre-padded to a multiple of tn),
    b: (1, N) f32 -> (M, N) f32.

    Only M is padded here (cheap; x is the small operand).  K is kept whole so
    there is no reduction grid axis and both grid axes are "parallel"
    (megacore-friendly).  Grid order (i outer, j inner): with tm covering M in
    one (or very few) tiles, W is streamed from HBM once.
    """
    M, K = x.shape
    Kw, N = w.shape
    assert K == Kw
    assert N % tn == 0, "pre-pad w/b columns to a multiple of tn (prepare_params)"
    assert b.shape == (1, N)

    tm = _pick_tm(M, tm_max)
    M_pad = _round_up(M, tm)
    x_p = jnp.pad(x, ((0, M_pad - M), (0, 0))) if M_pad != M else x

    # Double-buffered blocks + headroom; explicit so v7x (64 MiB physical /
    # 32 MiB scoped default) and v5e (16 MiB scoped default) behave predictably.
    vmem_limit = int(max(16 << 20,
                         2 * 4 * (tm * K + K * tn + tn + tm * tn) + (2 << 20)))

    out = pl.pallas_call(
        _matmul_bias_kernel,
        out_shape=jax.ShapeDtypeStruct((M_pad, N), jnp.float32),
        grid=(M_pad // tm, N // tn),
        in_specs=[
            pl.BlockSpec((tm, K), lambda i, j: (i, 0)),
            pl.BlockSpec((K, tn), lambda i, j: (0, j)),
            pl.BlockSpec((1, tn), lambda i, j: (0, j)),
        ],
        out_specs=pl.BlockSpec((tm, tn), lambda i, j: (i, j)),
        compiler_params=pltpu.CompilerParams(
            dimension_semantics=("parallel", "parallel"),
            vmem_limit_bytes=vmem_limit),
    )(x_p, w, b)
    return out[:M] if M_pad != M else out


# ---------------------------------------------------------------------------
# LSTM recurrence kernel: batch-blocked grid, in-kernel time loop.
# gx_ref : (S, bB, 4H)  precomputed x @ W_ih + bias, time-major (one B-block)
# whh_ref: (H, 4H)      hidden-to-hidden weights (resident across the grid)
# hs_ref : (S, bB, H)   per-step hidden states (output block)
# ---------------------------------------------------------------------------
def _lstm_recurrence_kernel(gx_ref, whh_ref, hs_ref):
    S, bB, _ = gx_ref.shape
    H = whh_ref.shape[0]
    whh = whh_ref[...]                      # load once, reuse every step
    unroll = True if S <= 8 else 4          # serial dep: full unroll only pays
                                            # for short sequences

    def step(t, carry):
        h, c = carry
        gates = gx_ref[t] + jnp.dot(h, whh,
                                    preferred_element_type=jnp.float32)
        # H is lane-aligned (multiple of 128) -> gate slices are whole tiles.
        i_g = jax.nn.sigmoid(gates[:, 0 * H:1 * H])
        f_g = jax.nn.sigmoid(gates[:, 1 * H:2 * H])
        g_g = jnp.tanh(gates[:, 2 * H:3 * H])
        o_g = jax.nn.sigmoid(gates[:, 3 * H:4 * H])
        c_new = f_g * c + i_g * g_g
        h_new = o_g * jnp.tanh(c_new)
        hs_ref[t] = h_new
        return (h_new, c_new)

    h0 = jnp.zeros((bB, H), jnp.float32)
    c0 = jnp.zeros((bB, H), jnp.float32)
    lax.fori_loop(0, S, step, (h0, c0), unroll=unroll)


def lstm_recurrence(gates_x_tm, whh, *, block_b):
    S, Bp, G = gates_x_tm.shape
    H = whh.shape[0]
    assert G == 4 * H
    assert Bp % block_b == 0 and block_b % 8 == 0

    gx_bytes = 4 * S * block_b * 4 * H
    hs_bytes = 4 * S * block_b * H
    whh_bytes = 4 * H * 4 * H
    vmem_limit = int(max(16 << 20,
                         2 * (gx_bytes + hs_bytes) + whh_bytes + (4 << 20)))

    return pl.pallas_call(
        _lstm_recurrence_kernel,
        out_shape=jax.ShapeDtypeStruct((S, Bp, H), jnp.float32),
        grid=(Bp // block_b,),
        in_specs=[
            pl.BlockSpec((S, block_b, 4 * H), lambda i: (0, i, 0)),
            pl.BlockSpec((H, 4 * H), lambda i: (0, 0)),
        ],
        out_specs=pl.BlockSpec((S, block_b, H), lambda i: (0, i, 0)),
        compiler_params=pltpu.CompilerParams(
            dimension_semantics=("parallel",),
            vmem_limit_bytes=vmem_limit),
    )(gates_x_tm, whh)


# ---------------------------------------------------------------------------
# One-time parameter preparation: pad the vocab dimension of W_fc / b_fc to a
# lane-tile multiple so no per-forward jnp.pad over the largest tensor occurs.
# ---------------------------------------------------------------------------
def prepare_params(params, *, tn=DEFAULT_TN):
    H = params["w_hh"].shape[0]
    assert H % 128 == 0, "hidden_dim must be lane-aligned (multiple of 128)"
    assert (4 * H) % tn == 0
    V = params["w_fc"].shape[1]
    V_pad = _round_up(V, tn)
    out = dict(params)
    out["w_fc"] = jnp.pad(params["w_fc"], ((0, 0), (0, V_pad - V)))
    out["b_fc"] = jnp.pad(params["b_fc"].reshape(1, -1), ((0, 0), (0, V_pad - V)))
    return out


# ---------------------------------------------------------------------------
# Full CaptionDecoder forward (expects prepare_params()-padded weights).
# ---------------------------------------------------------------------------
def caption_decoder_forward(params, features, captions, *, vocab_size=None,
                            tn=DEFAULT_TN):
    """features: f32 [B, E]; captions: int32 [B, T] -> logits f32 [B, T+1, V]."""
    emb_w = params["embedding"]      # (V, E)
    wih = params["w_ih"]             # (E, 4H)
    whh = params["w_hh"]             # (H, 4H)
    b = params["bias"]               # (1, 4H)
    wfc = params["w_fc"]             # (H, V_pad)   (pre-padded)
    bfc = params["b_fc"]             # (1, V_pad)

    B, T = captions.shape
    E = emb_w.shape[1]
    H = whh.shape[0]
    S = T + 1
    V_pad = wfc.shape[1]
    V = V_pad if vocab_size is None else vocab_size

    # Glue (embedding gather + concat) stays in plain JAX.  ResNet-50 encoder
    # is out of scope of this module's forward.
    embedded = jnp.take(emb_w, captions, axis=0)                        # (B, T, E)
    inputs = jnp.concatenate([features[:, None, :], embedded], axis=1)  # (B, S, E)

    # Batch blocking for the recurrence: keep per-step gates (bB, 4H) f32
    # within ~128 KiB so the step stays inside the vreg file.
    bB_cap = max(8, ((128 * 1024) // (16 * H)) // 8 * 8)
    bB = min(bB_cap, _round_up(B, 8))
    Bp = _round_up(B, bB)
    inputs_p = jnp.pad(inputs, ((0, Bp - B), (0, 0), (0, 0)))           # (Bp, S, E)

    # (1) Hoisted input-to-hidden matmul (+ bias) for all S steps at once,
    #     time-major so the recurrent kernel slices its leading axis.
    x_tm = jnp.transpose(inputs_p, (1, 0, 2)).reshape(S * Bp, E)        # (S*Bp, E)
    gates_x = matmul_bias(x_tm, wih, b, tn=tn, tm_max=512)              # (S*Bp, 4H)
    gates_x_tm = gates_x.reshape(S, Bp, 4 * H)

    # (2) Sequential recurrence: batch-blocked pipelined grid; only h @ W_hh
    #     is on the per-step critical path.
    hs_tm = lstm_recurrence(gates_x_tm, whh, block_b=bB)                # (S, Bp, H)

    # (3) Output projection.  Transpose hs (H columns -> V/H x cheaper than
    #     transposing logits), then one big lane-dense matmul with M covered
    #     by one / few tiles so W_fc streams from HBM once.
    hs_bm = jnp.transpose(hs_tm, (1, 0, 2)).reshape(Bp * S, H)          # (Bp*S, H)
    logits_flat = matmul_bias(hs_bm, wfc, bfc, tn=tn, tm_max=1024)      # (Bp*S, V_pad)
    logits = logits_flat.reshape(Bp, S, V_pad)[:B, :, :V]               # (B, S, V)
    return logits
    # TODO(synk): optional bf16 cast of matmul inputs (f32 accumulate) for
    # v6e/v7x MXU throughput; kept f32 here to preserve 1e-4 parity with torch.


# ---------------------------------------------------------------------------
# Pure-JAX reference matching torch nn.LSTM(batch_first=True) + Linear.
# ---------------------------------------------------------------------------
def caption_decoder_reference(params, features, captions):
    emb_w = params["embedding"]
    wih, whh, b = params["w_ih"], params["w_hh"], params["bias"]
    wfc, bfc = params["w_fc"], params["b_fc"]
    H = whh.shape[0]

    embedded = jnp.take(emb_w, captions, axis=0)
    inputs = jnp.concatenate([features[:, None, :], embedded], axis=1)
    B = inputs.shape[0]

    def step(carry, x_t):
        h, c = carry
        gates = x_t @ wih + h @ whh + b[0]
        i = jax.nn.sigmoid(gates[:, 0 * H:1 * H])
        f = jax.nn.sigmoid(gates[:, 1 * H:2 * H])
        g = jnp.tanh(gates[:, 2 * H:3 * H])
        o = jax.nn.sigmoid(gates[:, 3 * H:4 * H])
        c_new = f * c + i * g
        h_new = o * jnp.tanh(c_new)
        return (h_new, c_new), h_new

    h0 = jnp.zeros((B, H), jnp.float32)
    c0 = jnp.zeros((B, H), jnp.float32)
    _, hs = lax.scan(step, (h0, c0), jnp.swapaxes(inputs, 0, 1))  # (S, B, H)
    hs = jnp.swapaxes(hs, 0, 1)                                   # (B, S, H)
    return hs @ wfc + bfc[0]


def init_params(key, vocab_size, embedding_dim, hidden_dim):
    ks = jax.random.split(key, 6)
    scale = 0.1
    return {
        "embedding": jax.random.uniform(ks[0], (vocab_size, embedding_dim),
                                        jnp.float32, -scale, scale),
        "w_ih": jax.random.uniform(ks[1], (embedding_dim, 4 * hidden_dim),
                                   jnp.float32, -scale, scale),
        "w_hh": jax.random.uniform(ks[2], (hidden_dim, 4 * hidden_dim),
                                   jnp.float32, -scale, scale),
        # torch has b_ih + b_hh; fold into one bias row.
        "bias": jax.random.uniform(ks[3], (1, 4 * hidden_dim),
                                   jnp.float32, -scale, scale),
        "w_fc": jax.random.uniform(ks[4], (hidden_dim, vocab_size),
                                   jnp.float32, -scale, scale),
        "b_fc": jax.random.uniform(ks[5], (1, vocab_size),
                                   jnp.float32, -scale, scale),
    }


if __name__ == "__main__":
    # Small but TPU-friendly shapes consistent with the module's forward:
    #   vocab_size V (padded to the lane tile once in prepare_params),
    #   embedding_dim E (== image feature dim), hidden_dim H (lane-aligned).
    B, T = 2, 7            # batch, caption length (LSTM sees T+1 = 8 steps)
    V, E, H = 48, 128, 128

    key = jax.random.PRNGKey(0)
    kp, kf, kc = jax.random.split(key, 3)

    params = init_params(kp, V, E, H)
    prepped = prepare_params(params, tn=DEFAULT_TN)   # one-time weight padding
    features = jax.random.normal(kf, (B, E), jnp.float32)          # encoder output
    captions = jax.random.randint(kc, (B, T), 0, V, jnp.int32)     # token ids

    logits = caption_decoder_forward(prepped, features, captions, vocab_size=V)
    logits = jax.block_until_ready(logits)

    ref = caption_decoder_reference(params, features, captions)
    assert logits.shape == (B, T + 1, V)
    assert jnp.allclose(logits, ref, atol=1e-4, rtol=1e-4), \
        f"max abs err {jnp.max(jnp.abs(logits - ref))}"

    print("KERNEL_OK")
</pallas_src>

<mosaic_0001>
module attributes {stable_mosaic.version = 11 : i64} {
  func.func @_matmul_bias_kernel(%arg0: i32, %arg1: i32, %arg2: memref<64x128xf32, #tpu.memory_space<vmem>>, %arg3: memref<128x256xf32, #tpu.memory_space<vmem>>, %arg4: memref<1x256xf32, #tpu.memory_space<vmem>>, %arg5: memref<64x256xf32, #tpu.memory_space<vmem>>) attributes {dimension_semantics = [#tpu.dimension_semantics<parallel>, #tpu.dimension_semantics<parallel>], iteration_bounds = array<i64: 1, 2>, scalar_prefetch = 0 : i64, scratch_operands = 0 : i64, tpu.core_type = #tpu.core_type<tc>, window_params = [{transform_indices = @transform_0, window_bounds = array<i64: 64, 128>}, {transform_indices = @transform_1, window_bounds = array<i64: 128, 256>}, {transform_indices = @transform_2, window_bounds = array<i64: 1, 256>}, {transform_indices = @transform_3, window_bounds = array<i64: 64, 256>}]} {
    %c0 = arith.constant 0 : index
    %c0_0 = arith.constant 0 : index
    %0 = vector.load %arg2[%c0, %c0_0] : memref<64x128xf32, #tpu.memory_space<vmem>>, vector<64x128xf32>
    %c0_1 = arith.constant 0 : index
    %c0_2 = arith.constant 0 : index
    %1 = vector.load %arg3[%c0_1, %c0_2] : memref<128x256xf32, #tpu.memory_space<vmem>>, vector<128x256xf32>
    %cst = arith.constant dense<0.000000e+00> : vector<64x256xf32>
    %2 = tpu.matmul %0, %1, %cst {dimension_numbers = #tpu.dot_dimension_numbers<[1], [0], [0], [1], [0, 0, 1, 1], [], []>} : vector<64x128xf32>, vector<128x256xf32>, vector<64x256xf32> -> vector<64x256xf32>
    %c0_3 = arith.constant 0 : index
    %c0_4 = arith.constant 0 : index
    %3 = vector.load %arg4[%c0_3, %c0_4] : memref<1x256xf32, #tpu.memory_space<vmem>>, vector<1x256xf32>
    %4 = vector.broadcast %3 : vector<1x256xf32> to vector<64x256xf32>
    %5 = arith.addf %2, %4 : vector<64x256xf32>
    %c0_5 = arith.constant 0 : index
    %c0_6 = arith.constant 0 : index
    %6 = vector.load %arg5[%c0_5, %c0_6] : memref<64x256xf32, #tpu.memory_space<vmem>>, vector<64x256xf32>
    tpu.vector_store %arg5[%c0_5, %c0_6], %5 {strides = array<i32>} : memref<64x256xf32, #tpu.memory_space<vmem>>, vector<64x256xf32>,
    return
  }
  func.func @transform_0(%arg0: i32, %arg1: i32) -> (i32, i32) {
    %c0_i32 = arith.constant 0 : i32
    %c0_i32_0 = arith.constant 0 : i32
    return %arg0, %c0_i32 : i32, i32
  }
  func.func @transform_1(%arg0: i32, %arg1: i32) -> (i32, i32) {
    %c0_i32 = arith.constant 0 : i32
    %c0_i32_0 = arith.constant 0 : i32
    return %c0_i32, %arg1 : i32, i32
  }
  func.func @transform_2(%arg0: i32, %arg1: i32) -> (i32, i32) {
    %c0_i32 = arith.constant 0 : i32
    %c0_i32_0 = arith.constant 0 : i32
    return %c0_i32, %arg1 : i32, i32
  }
  func.func @transform_3(%arg0: i32, %arg1: i32) -> (i32, i32) {
    %c0_i32 = arith.constant 0 : i32
    return %arg0, %arg1 : i32, i32
  }
}

</mosaic_0001>

<llo_original>
// kernel: tpu_custom_call.1
$region0: #{tpu_custom_call.1}
  #allocation0 [shape = 'u32[]', space=smem, size = 0x4, offset = 0x4, fixed_abs, tag = 'smem constant byte address 0x4 - core index']
  #allocation1 [shape = 'u32[144,128]{1,0:T(1,128)}', space=vmem, size = 0x12000, scoped, tag = 'internal scratch']
  %s0 = inlined_call_operand.hbm [shape: f32[64,128], index: 0, kind: input, shape index: {}]
  %s1 = inlined_call_operand.hbm [shape: f32[128,512], index: 1, kind: input, shape index: {}]
  %s2 = inlined_call_operand.hbm [shape: f32[1,512], index: 2, kind: input, shape index: {}]
  %s3 = inlined_call_operand.hbm [shape: f32[64,512], index: 3, kind: output, shape index: {}]
  %s4 = sld [smem:[#allocation0]]
  $region57: #{tpu_custom_call.1} parent=0
    _
  %s6 = ssub.s32 1, %s4
  %s7 = scalar_select 0, %s6, %s4
  $region1: #{tpu_custom_call.1} parent=0
    #allocation2 [shape = 'u8[32768]{0}', space=vmem, size = 0x8000, scoped, tag = 'input window, operand 0, single buffered']
    #allocation3 [shape = 's32[2]{0}', space=sflag, size = 0x8, scoped, tag = 'scoped memory for tpu_custom_call.1']
    #allocation4 [shape = 's32[2]{0}', space=sflag, size = 0x8, scoped, tag = 'scoped memory for tpu_custom_call.1']
    #allocation5 [shape = 'u8[262144]{0}', space=vmem, size = 0x40000, scoped, tag = 'input window, operand 1']
    #allocation6 [shape = 's32[2]{0}', space=sflag, size = 0x8, scoped, tag = 'scoped memory for tpu_custom_call.1']
    #allocation7 [shape = 'u8[2048]{0}', space=vmem, size = 0x800, scoped, tag = 'input window, operand 2']
    #allocation8 [shape = 'u8[131072]{0}', space=vmem, size = 0x20000, scoped, tag = 'output window, operand 0']
    %8 = vsyncpa [#allocation3], 0
    %9 = vsyncpa [#allocation6], 0
    %s10 = scalar_lea.sflag [#allocation6], 1
    %11 = vsyncpa %s10, 0
    %12 = vsyncpa [#allocation4], 0
    %s13 = scalar_lea.sflag [#allocation4], 1
    %14 = vsyncpa %s13, 0
    loop: start=0, step=1, limit=4
    $region2: #{tpu_custom_call.1} parent=1 // loop_pre_header
      _
    $region3: #{tpu_custom_call.1} parent=1 // loop_header
      %s16 = sphi 0, %s20
      %p17 = scmp.ge.s32.totalorder %s16, 4
      %s23 = sphi 0, %s35
      %s24 = sphi 0, %s31
      %s25 = sphi 0, %s23
      %s26 = sphi 0, %s24
      %s27 = sphi 0, %s25
      %s28 = sphi 0, %s26
      %s38 = sphi 0, %s40
      %s41 = sphi 0, %s38
      %s42 = sphi 0, %s41
      %s58 = sphi 0, %s42
      %s64 = sphi 0, %s66
      %s67 = sphi 0, %s64
      %s68 = sphi 0, %s67
      %s84 = sphi 0, %s68
      %s90 = sphi 0, %s92
      %s93 = sphi 0, %s90
      %s94 = sphi 0, %s93
      %s110 = sphi 0, %s94
      %s118 = sphi 0, %s120
      %s121 = sphi 0, %s118
      %s122 = sphi 0, %s121
      %s138 = sphi 0, %s122
    $region4: #{tpu_custom_call.1} parent=1 // loop_header_branch
      %19 = sbr.rel (%p17) target = $region8
    $region5: #{tpu_custom_call.1} parent=1 // loop_body
      %s21 = ssub.s32 %s16, 1
      %s22 = ssub.s32 %s16, 2
      %s29 = sadd.s32 1, %s24
      %p30 = scmp.ge.s32.totalorder %s29, 2
      %s31 = scalar_select %p30, 0, %s29
      %s32 = sadd.s32 1, %s23
      %s33 = scalar_select %p30, %s32, %s23
      %p34 = scmp.ge.s32.totalorder %s33, 1
      %s35 = scalar_select %p34, 0, %s33
      %s36 = ssub.s32 %s23, %s35
      %p37 = scmp.eq.s32.totalorder %s36, 0
      %s39 = sadd.s32 %s38, 1
      %s40 = scalar_select %p37, %s38, %s39
      %p43 = pneg %p37
      %p44 = scmp.eq.s32.totalorder %s16, 1
      %p45 = por %p43, %p44
      %p46 = scmp.ne.s32.totalorder %s38, %s41
      %p47 = scmp.eq.s32.totalorder %s16, 0
      %p48 = por %p46, %p47
      %p49 = scmp.ne.s32.totalorder %s38, %s41
      %p50 = scmp.eq.s32.totalorder %s21, 1
      %p51 = por %p49, %p50
      %p52 = scmp.ne.s32.totalorder %s41, %s42
      %p53 = scmp.eq.s32.totalorder %s21, 0
      %p54 = por %p52, %p53
      %p55 = scmp.ne.s32.totalorder %s41, %s42
      %p56 = scmp.eq.s32.totalorder %s22, 1
      %p57 = por %p55, %p56
      %p59 = scmp.ne.s32.totalorder %s42, %s58
      %p60 = scmp.eq.s32.totalorder %s22, 0
      %p61 = por %p59, %p60
      %s62 = ssub.s32 %s24, %s31
      %p63 = scmp.eq.s32.totalorder %s62, 0
      %s65 = sadd.s32 %s64, 1
      %s66 = scalar_select %p63, %s64, %s65
      %p69 = pneg %p63
      %p70 = scmp.eq.s32.totalorder %s16, 1
      %p71 = por %p69, %p70
      %p72 = scmp.ne.s32.totalorder %s64, %s67
      %p73 = scmp.eq.s32.totalorder %s16, 0
      %p74 = por %p72, %p73
      %p75 = scmp.ne.s32.totalorder %s64, %s67
      %p76 = scmp.eq.s32.totalorder %s21, 1
      %p77 = por %p75, %p76
      %p78 = scmp.ne.s32.totalorder %s67, %s68
      %p79 = scmp.eq.s32.totalorder %s21, 0
      %p80 = por %p78, %p79
      %p81 = scmp.ne.s32.totalorder %s67, %s68
      %p82 = scmp.eq.s32.totalorder %s22, 1
      %p83 = por %p81, %p82
      %p85 = scmp.ne.s32.totalorder %s68, %s84
      %p86 = scmp.eq.s32.totalorder %s22, 0
      %p87 = por %p85, %p86
      %s88 = ssub.s32 %s24, %s31
      %p89 = scmp.eq.s32.totalorder %s88, 0
      %s91 = sadd.s32 %s90, 1
      %s92 = scalar_select %p89, %s90, %s91
      %p95 = pneg %p89
      %p96 = scmp.eq.s32.totalorder %s16, 1
      %p97 = por %p95, %p96
      %p98 = scmp.ne.s32.totalorder %s90, %s93
      %p99 = scmp.eq.s32.totalorder %s16, 0
      %p100 = por %p98, %p99
      %p101 = scmp.ne.s32.totalorder %s90, %s93
      %p102 = scmp.eq.s32.totalorder %s21, 1
      %p103 = por %p101, %p102
      %p104 = scmp.ne.s32.totalorder %s93, %s94
      %p105 = scmp.eq.s32.totalorder %s21, 0
      %p106 = por %p104, %p105
      %p107 = scmp.ne.s32.totalorder %s93, %s94
      %p108 = scmp.eq.s32.totalorder %s22, 1
      %p109 = por %p107, %p108
      %p111 = scmp.ne.s32.totalorder %s94, %s110
      %p112 = scmp.eq.s32.totalorder %s22, 0
      %p113 = por %p111, %p112
      %s114 = ssub.s32 %s23, %s35
      %s115 = ssub.s32 %s24, %s31
      %s116 = sor.u32 %s114, %s115
      %p117 = scmp.eq.s32.totalorder %s116, 0
      %s119 = sadd.s32 %s118, 1
      %s120 = scalar_select %p117, %s118, %s119
      %p123 = pneg %p117
      %p124 = scmp.eq.s32.totalorder %s16, 1
      %p125 = por %p123, %p124
      %p126 = scmp.ne.s32.totalorder %s118, %s121
      %p127 = scmp.eq.s32.totalorder %s16, 0
      %p128 = por %p126, %p127
      %p129 = scmp.ne.s32.totalorder %s118, %s121
      %p130 = scmp.eq.s32.totalorder %s21, 1
      %p131 = por %p129, %p130
      %p132 = scmp.ne.s32.totalorder %s121, %s122
      %p133 = scmp.eq.s32.totalorder %s21, 0
      %p134 = por %p132, %p133
      %p135 = scmp.ne.s32.totalorder %s121, %s122
      %p136 = scmp.eq.s32.totalorder %s22, 1
      %p137 = por %p135, %p136
      %p139 = scmp.ne.s32.totalorder %s122, %s138
      %p140 = scmp.eq.s32.totalorder %s22, 0
      %p141 = por %p139, %p140
      %p142 = scmp.le.s32.totalorder 1, %s16
      %p143 = scmp.lt.s32.totalorder %s16, 3
      %p144 = pnand %p142, %p143
      %p145 = pneg %p144
      // Predicated region
      $region9: #{tpu_custom_call.1} parent=5 // pred_check
        _
      $region10: #{tpu_custom_call.1} parent=5 // pred_check_branch
        %147 = sbr.rel (%p144) target = $region12
      $region11: #{tpu_custom_call.1} parent=5 // pred_region
        %s148 = ssub.s32 %s16, 1
        // Predicated region
        $region13: #{tpu_custom_call.1} parent=11 // pred_check
          %p149 = pneg %p54
        $region14: #{tpu_custom_call.1} parent=11 // pred_check_branch
          %151 = sbr.rel (%p149) target = $region16
        $region15: #{tpu_custom_call.1} parent=11 // pred_region
          %s152 = smul.u32 8, %s25
          %s154 = ssub.s32 1024, 1024
          %155 = vsyncadd [#allocation3], %s154
          %s156 = smul.addr %s152, 128
          %s157 = scalar_lea.hbm %s0, %s156
          %s158 = sshll.u32 [#allocation2], 4
          %s159 = int_to_ptr.vmem [resolvable:$true] %s158
          %164 = dma.hbm_to_vmem [thread:$0]  %s157, 1024, %s159, [#allocation3], 128, 128, 8
        $region16: #{tpu_custom_call.1} parent=11 // pred_fallthru
          _
      $region12: #{tpu_custom_call.1} parent=5 // pred_fallthru
        _
      %p165 = scmp.lt.s32.totalorder %s16, 2
      // Predicated region
      $region17: #{tpu_custom_call.1} parent=5 // pred_check
        %p166 = pneg %p165
      $region18: #{tpu_custom_call.1} parent=5 // pred_check_branch
        %168 = sbr.rel (%p166) target = $region20
      $region19: #{tpu_custom_call.1} parent=5 // pred_region
        // Predicated region
        $region21: #{tpu_custom_call.1} parent=19 // pred_check
          %p169 = pneg %p74
        $region22: #{tpu_custom_call.1} parent=19 // pred_check_branch
          %171 = sbr.rel (%p169) target = $region24
        $region23: #{tpu_custom_call.1} parent=19 // pred_region
          %s172 = sand.u32 %s16, 1
          %s173 = scalar_lea.sflag [#allocation6], %s172
          %s174 = sand.u32 %s64, 1
          %s175 = smul.addr %s174, 256
          %s176 = scalar_lea.vmem [#allocation5], %s175
          %s177 = smul.u32 2, %s24
          %s179 = ssub.s32 4096, 4096
          %180 = vsyncadd %s173, %s179
          %s181 = smul.addr %s177, 128
          %s182 = scalar_lea.hbm %s1, %s181
          %s183 = sshll.u32 %s176, 4
          %s184 = int_to_ptr.vmem [resolvable:$true] %s183
          %189 = dma.hbm_to_vmem [thread:$0]  %s182, 4096, %s184, %s173, 512, 256, 16
        $region24: #{tpu_custom_call.1} parent=19 // pred_fallthru
          _
        // Predicated region
        $region25: #{tpu_custom_call.1} parent=19 // pred_check
          %p190 = pneg %p100
        $region26: #{tpu_custom_call.1} parent=19 // pred_check_branch
          %192 = sbr.rel (%p190) target = $region28
        $region27: #{tpu_custom_call.1} parent=19 // pred_region
          %s193 = sand.u32 %s16, 1
          %s194 = scalar_lea.sflag [#allocation6], %s193
          %s195 = sand.u32 %s90, 1
          %s196 = smul.addr %s195, 2
          %s197 = scalar_lea.vmem [#allocation7], %s196
          %s198 = smul.u32 2, %s24
          %s200 = ssub.s32 32, 32
          %201 = vsyncadd %s194, %s200
          %s202 = smul.addr %s198, 16
          %s203 = scalar_lea.hbm %s2, %s202
          %s205 = sshll.u32 %s197, 4
          %s206 = int_to_ptr.vmem [resolvable:$true] %s205
          %208 = dma.hbm_to_vmem [thread:$0]  %s203, 32, %s206, %s194
        $region28: #{tpu_custom_call.1} parent=19 // pred_fallthru
          _
      $region20: #{tpu_custom_call.1} parent=5 // pred_fallthru
        _
      %p209 = scmp.le.s32.totalorder 1, %s16
      %p210 = scmp.lt.s32.totalorder %s16, 3
      %p211 = pnand %p209, %p210
      %p212 = pneg %p211
      // Predicated region
      $region29: #{tpu_custom_call.1} parent=5 // pred_check
        _
      $region30: #{tpu_custom_call.1} parent=5 // pred_check_branch
        %214 = sbr.rel (%p211) target = $region32
      $region31: #{tpu_custom_call.1} parent=5 // pred_region
        %s215 = ssub.s32 %s16, 1
        // Predicated region
        $region33: #{tpu_custom_call.1} parent=31 // pred_check
          %p216 = pneg %p54
        $region34: #{tpu_custom_call.1} parent=31 // pred_check_branch
          %218 = sbr.rel (%p216) target = $region36
        $region35: #{tpu_custom_call.1} parent=31 // pred_region
          %219 = dma.done [#allocation3], 1024
        $region36: #{tpu_custom_call.1} parent=31 // pred_fallthru
          _
        %s220 = sand.u32 %s21, 1
        %s221 = scalar_lea.sflag [#allocation6], %s220
        %s222 = sand.u32 %s67, 1
        %s223 = smul.addr %s222, 256
        %s224 = scalar_lea.vmem [#allocation5], %s223
        // Predicated region
        $region37: #{tpu_custom_call.1} parent=31 // pred_check
          %p225 = pneg %p80
        $region38: #{tpu_custom_call.1} parent=31 // pred_check_branch
          %227 = sbr.rel (%p225) target = $region40
        $region39: #{tpu_custom_call.1} parent=31 // pred_region
          %228 = dma.done %s221, 4096
        $region40: #{tpu_custom_call.1} parent=31 // pred_fallthru
          _
        %s229 = sand.u32 %s21, 1
        %s230 = scalar_lea.sflag [#allocation6], %s229
        %s231 = sand.u32 %s93, 1
        %s232 = smul.addr %s231, 2
        %s233 = scalar_lea.vmem [#allocation7], %s232
        // Predicated region
        $region41: #{tpu_custom_call.1} parent=31 // pred_check
          %p234 = pneg %p106
        $region42: #{tpu_custom_call.1} parent=31 // pred_check_branch
          %236 = sbr.rel (%p234) target = $region44
        $region43: #{tpu_custom_call.1} parent=31 // pred_region
          %237 = dma.done %s230, 32
        $region44: #{tpu_custom_call.1} parent=31 // pred_fallthru
          _
        %p238 = pneg %p54
        %p239 = pneg %p51
        %s240 = sand.u32 %s21, 1
        %s241 = scalar_lea.sflag [#allocation6], %s240
        %s242 = sand.u32 %s67, 1
        %s243 = smul.addr %s242, 256
        %s244 = scalar_lea.vmem [#allocation5], %s243
        %p245 = pneg %p80
        %p246 = pneg %p77
        %s247 = sand.u32 %s21, 1
        %s248 = scalar_lea.sflag [#allocation6], %s247
        %s249 = sand.u32 %s93, 1
        %s250 = smul.addr %s249, 2
        %s251 = scalar_lea.vmem [#allocation7], %s250
        %p252 = pneg %p106
        %p253 = pneg %p103
        %p254 = pneg %p134
        %p255 = pneg %p131
        %s256 = sand.u32 %s121, 1
        %s257 = scalar_lea.sflag [#allocation4], %s256
        %s258 = sand.u32 %s121, 1
        %s259 = smul.addr %s258, 128
        %s260 = scalar_lea.vmem [#allocation8], %s259
        %s261 = smul.u32 8, %s25
        %s262 = smul.u32 2, %s26
        %s263 = smul.u32 2, %s26
        %s264 = smul.u32 8, %s25
        %s265 = smul.u32 2, %s26
        %v266 = vld [vmem:[#allocation2] sm:$0xff]
        %v267 = vld [vmem:[#allocation2 + $0x8] sm:$0xff]
        %v268 = vld [vmem:[#allocation2 + $0x10] sm:$0xff]
        %v269 = vld [vmem:[#allocation2 + $0x18] sm:$0xff]
        %v270 = vld [vmem:[#allocation2 + $0x20] sm:$0xff]
        %v271 = vld [vmem:[#allocation2 + $0x28] sm:$0xff]
        %v272 = vld [vmem:[#allocation2 + $0x30] sm:$0xff]
        %v273 = vld [vmem:[#allocation2 + $0x38] sm:$0xff]
        %v274 = vld [vmem:[%s224] sm:$0xff]
        %v275 = vld [vmem:[%s224 + $0x8] sm:$0xff]
        %v276 = vld [vmem:[%s224 + $0x10] sm:$0xff]
        %v277 = vld [vmem:[%s224 + $0x18] sm:$0xff]
        %v278 = vld [vmem:[%s224 + $0x20] sm:$0xff]
        %v279 = vld [vmem:[%s224 + $0x28] sm:$0xff]
        %v280 = vld [vmem:[%s224 + $0x30] sm:$0xff]
        %v281 = vld [vmem:[%s224 + $0x38] sm:$0xff]
        %v282 = vld [vmem:[%s224 + $0x40] sm:$0xff]
        %v283 = vld [vmem:[%s224 + $0x48] sm:$0xff]
        %v284 = vld [vmem:[%s224 + $0x50] sm:$0xff]
        %v285 = vld [vmem:[%s224 + $0x58] sm:$0xff]
        %v286 = vld [vmem:[%s224 + $0x60] sm:$0xff]
        %v287 = vld [vmem:[%s224 + $0x68] sm:$0xff]
        %v288 = vld [vmem:[%s224 + $0x70] sm:$0xff]
        %v289 = vld [vmem:[%s224 + $0x78] sm:$0xff]
        %v290 = vld [vmem:[%s224 + $0x80] sm:$0xff]
        %v291 = vld [vmem:[%s224 + $0x88] sm:$0xff]
        %v292 = vld [vmem:[%s224 + $0x90] sm:$0xff]
        %v293 = vld [vmem:[%s224 + $0x98] sm:$0xff]
        %v294 = vld [vmem:[%s224 + $0xa0] sm:$0xff]
        %v295 = vld [vmem:[%s224 + $0xa8] sm:$0xff]
        %v296 = vld [vmem:[%s224 + $0xb0] sm:$0xff]
        %v297 = vld [vmem:[%s224 + $0xb8] sm:$0xff]
        %v298 = vld [vmem:[%s224 + $0xc0] sm:$0xff]
        %v299 = vld [vmem:[%s224 + $0xc8] sm:$0xff]
        %v300 = vld [vmem:[%s224 + $0xd0] sm:$0xff]
        %v301 = vld [vmem:[%s224 + $0xd8] sm:$0xff]
        %v302 = vld [vmem:[%s224 + $0xe0] sm:$0xff]
        %v303 = vld [vmem:[%s224 + $0xe8] sm:$0xff]
        %v304 = vld [vmem:[%s224 + $0xf0] sm:$0xff]
        %v305 = vld [vmem:[%s224 + $0xf8] sm:$0xff]
        %v306 = vld [vmem:[%s233] sm:$0x3]
        %v308 = vlaneseq
        %v309 = vshrl.u32 %v308, 7
        %v310 = vsub.s32 0, %v309
        %v311 = vrot.slane %v306, %v310
        %v312 = vlaneseq
        %v313 = vshrl.u32 %v312, 7
        %v314 = vsub.s32 1, %v313
        %v315 = vrot.slane %v306, %v314
        %318 = vmatprep.subr.mxu0 %v305
        %319 = vmatpush1.msra.mxu0 %v304
        %320 = vmatprep.subr.mxu0 %v303
        %321 = vmatpush1.msra.mxu0 %v302
        %322 = vmatprep.subr.mxu0 %v301
        %323 = vmatpush1.msra.mxu0 %v300
        %324 = vmatprep.subr.mxu0 %v299
        %325 = vmatpush1.msra.mxu0 %v298
        %326 = vmatprep.subr.mxu0 %v297
        %327 = vmatpush1.msra.mxu0 %v296
        %328 = vmatprep.subr.mxu0 %v295
        %329 = vmatpush1.msra.mxu0 %v294
        %330 = vmatprep.subr.mxu0 %v293
        %331 = vmatpush1.msra.mxu0 %v292
        %332 = vmatprep.subr.mxu0 %v291
        %333 = vmatpush1.msra.mxu0 %v290
        %334 = vmatprep.subr.mxu0 %v289
        %335 = vmatpush1.msra.mxu0 %v288
        %336 = vmatprep.subr.mxu0 %v287
        %337 = vmatpush1.msra.mxu0 %v286
        %338 = vmatprep.subr.mxu0 %v285
        %339 = vmatpush1.msra.mxu0 %v284
        %340 = vmatprep.subr.mxu0 %v283
        %341 = vmatpush1.msra.mxu0 %v282
        %342 = vmatprep.subr.mxu0 %v281
        %343 = vmatpush1.msra.mxu0 %v280
        %344 = vmatprep.subr.mxu0 %v279
        %345 = vmatpush1.msra.mxu0 %v278
        %346 = vmatprep.subr.mxu0 %v277
        %347 = vmatpush1.msra.mxu0 %v276
        %348 = vmatprep.subr.mxu0 %v275
        %349 = vmatpush1.msra.mxu0 %v274
        %350 = vmatprep.subr.mxu0 0.0
        %351 = vmatpush2.msra.mxu0 0.0
        %352 = vmatprep.subr.mxu0 0.0
        %353 = vmatpush2.msra.mxu0 0.0
        %354 = vmatprep.subr.mxu0 0.0
        %355 = vmatpush2.msra.mxu0 0.0
        %356 = vmatprep.subr.mxu0 0.0
        %357 = vmatpush2.msra.mxu0 0.0
        %358 = vmatprep.subr.mxu0 0.0
        %359 = vmatpush2.msra.mxu0 0.0
        %360 = vmatprep.subr.mxu0 0.0
        %361 = vmatpush2.msra.mxu0 0.0
        %362 = vmatprep.subr.mxu0 0.0
        %363 = vmatpush2.msra.mxu0 0.0
        %364 = vmatprep.subr.mxu0 0.0
        %365 = vmatpush2.msra.mxu0 0.0
        %366 = vmatprep.subr.mxu0 0.0
        %367 = vmatpush2.msra.mxu0 0.0
        %368 = vmatprep.subr.mxu0 0.0
        %369 = vmatpush2.msra.mxu0 0.0
        %370 = vmatprep.subr.mxu0 0.0
        %371 = vmatpush2.msra.mxu0 0.0
        %372 = vmatprep.subr.mxu0 0.0
        %373 = vmatpush2.msra.mxu0 0.0
        %374 = vmatprep.subr.mxu0 0.0
        %375 = vmatpush2.msra.mxu0 0.0
        %376 = vmatprep.subr.mxu0 0.0
        %377 = vmatpush2.msra.mxu0 0.0
        %378 = vmatprep.subr.mxu0 0.0
        %379 = vmatpush2.msra.mxu0 0.0
        %380 = vmatprep.subr.mxu0 0.0
        %381 = vmatpush2.msra.mxu0 0.0
        %382 = vmatprep.mubr.f32.mxu0 0.0
        %383 = vmatmul.mubr.f32.gmra.mxu0 %v266
        %v384 = vpop.f32.mrf.mxu0
        %v385 = vadd.f32 %v311, %v384
        %v386 = vpop.f32.mrf.mxu0
        %v387 = vadd.f32 %v315, %v386
        %388 = vmatprep.mubr.f32.mxu0 0.0
        %389 = vmatmul.mubr.f32.gmra.mxu0 %v267
        %v390 = vpop.f32.mrf.mxu0
        %v391 = vadd.f32 %v311, %v390
        %v392 = vpop.f32.mrf.mxu0
        %v393 = vadd.f32 %v315, %v392
        %394 = vmatprep.mubr.f32.mxu0 0.0
        %395 = vmatmul.mubr.f32.gmra.mxu0 %v268
        %v396 = vpop.f32.mrf.mxu0
        %v397 = vadd.f32 %v311, %v396
        %v398 = vpop.f32.mrf.mxu0
        %v399 = vadd.f32 %v315, %v398
        %400 = vmatprep.mubr.f32.mxu0 0.0
        %401 = vmatmul.mubr.f32.gmra.mxu0 %v269
        %v402 = vpop.f32.mrf.mxu0
        %v403 = vadd.f32 %v311, %v402
        %v404 = vpop.f32.mrf.mxu0
        %v405 = vadd.f32 %v315, %v404
        %406 = vmatprep.mubr.f32.mxu0 0.0
        %407 = vmatmul.mubr.f32.gmra.mxu0 %v270
        %v408 = vpop.f32.mrf.mxu0
        %v409 = vadd.f32 %v311, %v408
        %v410 = vpop.f32.mrf.mxu0
        %v411 = vadd.f32 %v315, %v410
        %412 = vmatprep.mubr.f32.mxu0 0.0
        %413 = vmatmul.mubr.f32.gmra.mxu0 %v271
        %v414 = vpop.f32.mrf.mxu0
        %v415 = vadd.f32 %v311, %v414
        %v416 = vpop.f32.mrf.mxu0
        %v417 = vadd.f32 %v315, %v416
        %418 = vmatprep.mubr.f32.mxu0 0.0
        %419 = vmatmul.mubr.f32.gmra.mxu0 %v272
        %v420 = vpop.f32.mrf.mxu0
        %v421 = vadd.f32 %v311, %v420
        %v422 = vpop.f32.mrf.mxu0
        %v423 = vadd.f32 %v315, %v422
        %424 = vmatprep.mubr.f32.mxu0 0.0
        %425 = vmatmul.mubr.f32.gmra.mxu0 %v273
        %v426 = vpop.f32.mrf.mxu0
        %v427 = vadd.f32 %v311, %v426
        %v428 = vpop.f32.mrf.mxu0
        %v429 = vadd.f32 %v315, %v428
        %430 = vdwg.mxu0
        %431 = vst [vmem:[%s260] sm:$0xff] %v385
        %432 = vst [vmem:[%s260 + $0x8] sm:$0xff] %v387
        %433 = vst [vmem:[%s260 + $0x10] sm:$0xff] %v391
        %434 = vst [vmem:[%s260 + $0x18] sm:$0xff] %v393
        %435 = vst [vmem:[%s260 + $0x20] sm:$0xff] %v397
        %436 = vst [vmem:[%s260 + $0x28] sm:$0xff] %v399
        %437 = vst [vmem:[%s260 + $0x30] sm:$0xff] %v403
        %438 = vst [vmem:[%s260 + $0x38] sm:$0xff] %v405
        %439 = vst [vmem:[%s260 + $0x40] sm:$0xff] %v409
        %440 = vst [vmem:[%s260 + $0x48] sm:$0xff] %v411
        %441 = vst [vmem:[%s260 + $0x50] sm:$0xff] %v415
        %442 = vst [vmem:[%s260 + $0x58] sm:$0xff] %v417
        %443 = vst [vmem:[%s260 + $0x60] sm:$0xff] %v421
        %444 = vst [vmem:[%s260 + $0x68] sm:$0xff] %v423
        %445 = vst [vmem:[%s260 + $0x70] sm:$0xff] %v427
        %446 = vst [vmem:[%s260 + $0x78] sm:$0xff] %v429
        %s447 = sand.u32 %s121, 1
        %s448 = scalar_lea.sflag [#allocation4], %s447
        %s449 = sand.u32 %s121, 1
        %s450 = smul.addr %s449, 128
        %s451 = scalar_lea.vmem [#allocation8], %s450
        // Predicated region
        $region45: #{tpu_custom_call.1} parent=31 // pred_check
          %p452 = pneg %p131
        $region46: #{tpu_custom_call.1} parent=31 // pred_check_branch
          %454 = sbr.rel (%p452) target = $region48
        $region47: #{tpu_custom_call.1} parent=31 // pred_region
          %s455 = smul.u32 8, %s25
          %s456 = smul.u32 2, %s26
          %s458 = ssub.s32 2048, 2048
          %459 = vsyncadd %s448, %s458
          %s460 = smul.addr %s455, 4
          %s461 = sadd.s32 %s456, %s460
          %s462 = smul.addr %s461, 128
          %s463 = scalar_lea.hbm %s3, %s462
          %s464 = sshll.u32 %s451, 4
          %s465 = int_to_ptr.vmem [resolvable:$true] %s464
          %470 = dma.vmem_to_hbm [thread:$0]  %s465, 2048, %s463, %s448, 256, 512, 16
        $region48: #{tpu_custom_call.1} parent=31 // pred_fallthru
          _
      $region32: #{tpu_custom_call.1} parent=5 // pred_fallthru
        _
      %p471 = scmp.le.s32.totalorder 2, %s16
      // Predicated region
      $region49: #{tpu_custom_call.1} parent=5 // pred_check
        %p472 = pneg %p471
      $region50: #{tpu_custom_call.1} parent=5 // pred_check_branch
        %474 = sbr.rel (%p472) target = $region52
      $region51: #{tpu_custom_call.1} parent=5 // pred_region
        %s475 = ssub.s32 %s16, 2
        // Predicated region
        $region53: #{tpu_custom_call.1} parent=51 // pred_check
          %p476 = pneg %p137
        $region54: #{tpu_custom_call.1} parent=51 // pred_check_branch
          %478 = sbr.rel (%p476) target = $region56
        $region55: #{tpu_custom_call.1} parent=51 // pred_region
          %s479 = sand.u32 %s122, 1
          %s480 = scalar_lea.sflag [#allocation4], %s479
          %s481 = sand.u32 %s122, 1
          %s482 = smul.addr %s481, 128
          %s483 = scalar_lea.vmem [#allocation8], %s482
          %484 = dma.done %s480, 2048
        $region56: #{tpu_custom_call.1} parent=51 // pred_fallthru
          _
      $region52: #{tpu_custom_call.1} parent=5 // pred_fallthru
        _
    $region6: #{tpu_custom_call.1} parent=1 // loop_footer
      %s20 = sadd.s32 1, %s16
    $region7: #{tpu_custom_call.1} parent=1 // loop_footer_branch
      %15 = sbr.rel target = $region3
    $region8: #{tpu_custom_call.1} parent=1 // loop_exit
      _
    %485 = vsyncpa [#allocation3], 1
    %s486 = scalar_lea.sflag [#allocation3], 1
    %487 = vsyncpa %s486, 1
    %488 = vsyncpa [#allocation6], 1
    %s489 = scalar_lea.sflag [#allocation6], 1
    %490 = vsyncpa %s489, 1
    %491 = vsyncpa [#allocation4], 1
    %s492 = scalar_lea.sflag [#allocation4], 1
    %493 = vsyncpa %s492, 1

</llo_original>
